<compile_context>
chip_gen: v7x
topology: tpu7x:2x2x1
jax: 0.10.0
libtpu: 0.0.40
codegen_flags: <defaults>
</compile_context>

<pallas_src>
import math
import functools

import jax
import jax.numpy as jnp
from jax.experimental import pallas as pl
from jax.experimental.pallas import tpu as pltpu


def _fused_embed_kernel(idx_ref, w_ref, out_ref):
    """One grid step: gather-and-concat for one row tile.

    idx_ref : VMEM (tile_n, 2) int32      -- fused-vocab row indices (offsets pre-applied)
    w_ref   : VMEM (V_pad, Dout_pad) f32  -- resident block-diagonal fused table
    out_ref : VMEM (tile_n, Dout_pad) f32
    """
    idx = idx_ref[...]                       # (tile_n, 2)
    tn = idx.shape[0]
    v_pad = w_ref.shape[0]

    col1 = idx[:, 0:1]                       # (tile_n, 1) -> first-half block row
    col2 = idx[:, 1:2]                       # (tile_n, 1) -> second-half block row

    lanes = jax.lax.broadcasted_iota(jnp.int32, (tn, v_pad), 1)
    # Two ones per row; the two hit disjoint vocab blocks whose table rows are
    # zero in the "other" output half, so one matmul == concat of both lookups.
    twohot = ((lanes == col1) | (lanes == col2)).astype(jnp.float32)

    out_ref[...] = jnp.dot(twohot, w_ref[...], preferred_element_type=jnp.float32)


def _round_up(x, m):
    return ((x + m - 1) // m) * m


@functools.partial(jax.jit, static_argnames=("d_out", "tile_n"))
def fused_feature_embedding(graph_x, graph_edge_attr, w_fused, node_offs, edge_offs,
                            *, d_out, tile_n=256):
    """Single-launch fused embedding for both node and edge feature pairs."""
    N = graph_x.shape[0]
    E = graph_edge_attr.shape[0]
    V_pad, Dout_pad = w_fused.shape

    # Shrink the row tile for tiny graphs (keeps sublane alignment of 8).
    tile_n = min(tile_n, max(_round_up(max(N, E, 1), 8), 8))

    Np = _round_up(N, tile_n)
    Ep = _round_up(E, tile_n)

    # Pad rows (padding rows land on the block base row -> always in-vocab) and
    # fold the fused-vocab block offsets directly into the indices; this all
    # fuses into the pad/concat under jit.
    idx_nodes = (jnp.zeros((Np, 2), jnp.int32).at[:N].set(graph_x.astype(jnp.int32))
                 + node_offs[None, :])
    idx_edges = (jnp.zeros((Ep, 2), jnp.int32).at[:E].set(graph_edge_attr.astype(jnp.int32))
                 + edge_offs[None, :])
    idx_all = jnp.concatenate([idx_nodes, idx_edges], axis=0)

    n_tiles = (Np + Ep) // tile_n

    out = pl.pallas_call(
        _fused_embed_kernel,
        out_shape=jax.ShapeDtypeStruct((n_tiles * tile_n, Dout_pad), jnp.float32),
        grid_spec=pltpu.PrefetchScalarGridSpec(
            num_scalar_prefetch=0,
            grid=(n_tiles,),
            in_specs=[
                pl.BlockSpec((tile_n, 2), lambda i: (i, 0)),          # index pairs
                pl.BlockSpec((V_pad, Dout_pad), lambda i: (0, 0)),    # fused table (resident)
            ],
            out_specs=pl.BlockSpec((tile_n, Dout_pad), lambda i: (i, 0)),
        ),
        compiler_params=pltpu.CompilerParams(dimension_semantics=("parallel",)),
    )(idx_all, w_fused)

    atom_features = out[:N, :d_out]
    edge_features = out[Np:Np + E, :d_out]
    return atom_features, edge_features


class FeatureEmbeddingPallas:
    """JAX/Pallas port of the PyTorch FeatureEmbedding module."""

    def __init__(self, key, embedding_dim=128, num_unique_atoms=100,
                 num_unique_charges=13, num_unique_bonds=10):
        self.num_unique_charges = num_unique_charges
        k1, k2, k3, k4 = jax.random.split(key, 4)
        # nn.Embedding default init is N(0, 1).
        self.w_atom = jax.random.normal(k1, (num_unique_atoms, embedding_dim), jnp.float32)
        self.w_charge = jax.random.normal(k2, (num_unique_charges, embedding_dim), jnp.float32)
        self.w_bond = jax.random.normal(k3, (num_unique_bonds, embedding_dim), jnp.float32)
        self.w_arom = jax.random.normal(k4, (2, embedding_dim), jnp.float32)

        v_atom, v_charge, v_bond, v_arom = (
            num_unique_atoms, num_unique_charges, num_unique_bonds, 2)
        D = embedding_dim
        V = v_atom + v_charge + v_bond + v_arom
        V_pad = _round_up(V, 128)             # lane-dense fused vocab
        Dout = 2 * D
        Dout_pad = _round_up(Dout, 128)       # lane-dense output stores

        # Block-diagonal fused table, built once (not per forward call).
        w_fused = jnp.zeros((V_pad, Dout_pad), jnp.float32)
        r = 0
        w_fused = w_fused.at[r:r + v_atom, 0:D].set(self.w_atom); r += v_atom
        w_fused = w_fused.at[r:r + v_charge, D:Dout].set(self.w_charge); r += v_charge
        w_fused = w_fused.at[r:r + v_bond, 0:D].set(self.w_bond); r += v_bond
        w_fused = w_fused.at[r:r + v_arom, D:Dout].set(self.w_arom)
        self.w_fused = w_fused

        charge_offset = math.ceil(num_unique_charges / 2)
        # Node pairs: feature0 -> atom block, feature1 -> charge block (+charge shift).
        self.node_offs = jnp.array([0, v_atom + charge_offset], jnp.int32)
        # Edge pairs: feature0 -> bond block, feature1 -> aromaticity block.
        self.edge_offs = jnp.array([v_atom + v_charge, v_atom + v_charge + v_bond], jnp.int32)
        self.d_out = Dout

    def __call__(self, graph_x, graph_edge_attr, *, tile_n=256):
        return fused_feature_embedding(
            graph_x, graph_edge_attr, self.w_fused, self.node_offs, self.edge_offs,
            d_out=self.d_out, tile_n=tile_n)


def _reference(model, graph_x, graph_edge_attr):
    off = math.ceil(model.num_unique_charges / 2)
    a = jnp.take(model.w_atom, graph_x[:, 0], axis=0)
    c = jnp.take(model.w_charge, graph_x[:, 1] + off, axis=0)
    b = jnp.take(model.w_bond, graph_edge_attr[:, 0], axis=0)
    r = jnp.take(model.w_arom, graph_edge_attr[:, 1], axis=0)
    return jnp.concatenate([a, c], axis=1), jnp.concatenate([b, r], axis=1)


if __name__ == "__main__":
    key = jax.random.PRNGKey(0)
    k_params, k_atom, k_charge, k_bond, k_arom = jax.random.split(key, 5)

    embedding_dim = 32
    num_atoms_nodes = 8     # N nodes (not a multiple of the tile -> exercises padding)
    num_edges = 8           # E edges

    model = FeatureEmbeddingPallas(k_params, embedding_dim=embedding_dim)

    # graph_x: [N, 2] = (atomic_num in [0,100), formal_charge in [-6,5])
    atomic_nums = jax.random.randint(k_atom, (num_atoms_nodes, 1), 0, 100, jnp.int32)
    formal_charges = jax.random.randint(k_charge, (num_atoms_nodes, 1), -6, 6, jnp.int32)
    graph_x = jnp.concatenate([atomic_nums, formal_charges], axis=1)

    # graph_edge_attr: [E, 2] = (bond_num in [0,10), aromaticity in {0,1})
    bond_nums = jax.random.randint(k_bond, (num_edges, 1), 0, 10, jnp.int32)
    aromaticity = jax.random.randint(k_arom, (num_edges, 1), 0, 2, jnp.int32)
    graph_edge_attr = jnp.concatenate([bond_nums, aromaticity], axis=1)

    atom_features, edge_features = model(graph_x, graph_edge_attr)
    jax.block_until_ready((atom_features, edge_features))

    ref_atom, ref_edge = _reference(model, graph_x, graph_edge_attr)
    assert atom_features.shape == (num_atoms_nodes, 2 * embedding_dim)
    assert edge_features.shape == (num_edges, 2 * embedding_dim)
    assert jnp.allclose(atom_features, ref_atom, atol=1e-6)
    assert jnp.allclose(edge_features, ref_edge, atol=1e-6)

    print("KERNEL_OK")
</pallas_src>

<mosaic_0001>
module attributes {stable_mosaic.version = 11 : i64} {
  func.func @_fused_embed_kernel(%arg0: i32, %arg1: memref<8x2xi32, #tpu.memory_space<vmem>>, %arg2: memref<128x128xf32, #tpu.memory_space<vmem>>, %arg3: memref<8x128xf32, #tpu.memory_space<vmem>>) attributes {dimension_semantics = [#tpu.dimension_semantics<parallel>], iteration_bounds = array<i64: 2>, scalar_prefetch = 0 : i64, scratch_operands = 0 : i64, tpu.core_type = #tpu.core_type<tc>, window_params = [{transform_indices = @transform_0, window_bounds = array<i64: 8, 2>}, {pipeline_mode = #tpu.pipeline_mode<synchronous>, transform_indices = @transform_1, window_bounds = array<i64: 128, 128>}, {transform_indices = @transform_2, window_bounds = array<i64: 8, 128>}]} {
    %c0 = arith.constant 0 : index
    %c0_0 = arith.constant 0 : index
    %0 = vector.load %arg1[%c0, %c0_0] : memref<8x2xi32, #tpu.memory_space<vmem>>, vector<8x2xi32>
    %1 = vector.extract_strided_slice %0 {offsets = [0, 0], sizes = [8, 1], strides = [1, 1]} : vector<8x2xi32> to vector<8x1xi32>
    %2 = vector.extract_strided_slice %0 {offsets = [0, 1], sizes = [8, 1], strides = [1, 1]} : vector<8x2xi32> to vector<8x1xi32>
    %3 = tpu.iota {dimensions = array<i32: 1>} : vector<8x128xi32>
    %4 = vector.broadcast %1 : vector<8x1xi32> to vector<8x128xi32>
    %5 = arith.cmpi eq, %3, %4 : vector<8x128xi32>
    %6 = vector.broadcast %2 : vector<8x1xi32> to vector<8x128xi32>
    %7 = arith.cmpi eq, %3, %6 : vector<8x128xi32>
    %8 = arith.ori %5, %7 : vector<8x128xi1>
    %9 = arith.extui %8 : vector<8x128xi1> to vector<8x128xi32>
    %10 = arith.sitofp %9 : vector<8x128xi32> to vector<8x128xf32>
    %c0_1 = arith.constant 0 : index
    %c0_2 = arith.constant 0 : index
    %11 = vector.load %arg2[%c0_1, %c0_2] : memref<128x128xf32, #tpu.memory_space<vmem>>, vector<128x128xf32>
    %cst = arith.constant dense<0.000000e+00> : vector<8x128xf32>
    %12 = tpu.matmul %10, %11, %cst {dimension_numbers = #tpu.dot_dimension_numbers<[1], [0], [0], [1], [0, 0, 1, 1], [], []>} : vector<8x128xf32>, vector<128x128xf32>, vector<8x128xf32> -> vector<8x128xf32>
    %c0_3 = arith.constant 0 : index
    %c0_4 = arith.constant 0 : index
    %13 = vector.load %arg3[%c0_3, %c0_4] : memref<8x128xf32, #tpu.memory_space<vmem>>, vector<8x128xf32>
    tpu.vector_store %arg3[%c0_3, %c0_4], %12 {strides = array<i32>} : memref<8x128xf32, #tpu.memory_space<vmem>>, vector<8x128xf32>,
    return
  }
  func.func @transform_0(%arg0: i32) -> (i32, i32) {
    %c0_i32 = arith.constant 0 : i32
    %c0_i32_0 = arith.constant 0 : i32
    return %arg0, %c0_i32 : i32, i32
  }
  func.func @transform_1(%arg0: i32) -> (i32, i32) {
    %c0_i32 = arith.constant 0 : i32
    %c0_i32_0 = arith.constant 0 : i32
    %c0_i32_1 = arith.constant 0 : i32
    return %c0_i32, %c0_i32_0 : i32, i32
  }
  func.func @transform_2(%arg0: i32) -> (i32, i32) {
    %c0_i32 = arith.constant 0 : i32
    %c0_i32_0 = arith.constant 0 : i32
    return %arg0, %c0_i32 : i32, i32
  }
}

</mosaic_0001>

<llo_original>
// kernel: fused_feature_embedding.1
$region0: #{fused_feature_embedding.1}
  #allocation0 [shape = 'u32[]', space=smem, size = 0x4, offset = 0x4, fixed_abs, tag = 'smem constant byte address 0x4 - core index']
  #allocation1 [shape = 'u32[144,128]{1,0:T(1,128)}', space=vmem, size = 0x12000, scoped, tag = 'internal scratch']
  %s0 = inlined_call_operand.vmem [shape: s32[16,2], index: 0, kind: input, shape index: {}]
  %s1 = inlined_call_operand.hbm [shape: f32[128,128], index: 1, kind: input, shape index: {}]
  %s2 = inlined_call_operand.vmem [shape: f32[16,128], index: 2, kind: output, shape index: {}]
  %s3 = sld [smem:[#allocation0]]
  $region45: #{fused_feature_embedding.1} parent=0
    _
  %s5 = ssub.s32 1, %s3
  %s6 = scalar_select 0, %s5, %s3
  $region1: #{fused_feature_embedding.1} parent=0
    #allocation2 [shape = 'u8[65536]{0}', space=vmem, size = 0x10000, scoped, tag = 'input window, operand 1, single buffered']
    #allocation3 [shape = 's32[2]{0}', space=sflag, size = 0x8, scoped, tag = 'scoped memory for fused_feature_embedding.1']
    %7 = vsyncpa [#allocation3], 0
    loop: start=0, step=1, limit=4
    $region2: #{fused_feature_embedding.1} parent=1 // loop_pre_header
      _
    $region3: #{fused_feature_embedding.1} parent=1 // loop_header
      %s9 = sphi 0, %s13
      %p10 = scmp.ge.s32.totalorder %s9, 4
      %s19 = sphi 0, %s21
      %s22 = sphi 0, %s19
      %s23 = sphi 0, %s22
      %s39 = sphi 0, %s23
      %s43 = sphi 0, %s43
      %s45 = sphi 0, %s43
      %s46 = sphi 0, %s45
      %s60 = sphi 0, %s46
      %s66 = sphi 0, %s68
      %s69 = sphi 0, %s66
      %s70 = sphi 0, %s69
      %s86 = sphi 0, %s70
    $region4: #{fused_feature_embedding.1} parent=1 // loop_header_branch
      %12 = sbr.rel (%p10) target = $region8
    $region5: #{fused_feature_embedding.1} parent=1 // loop_body
      %s14 = ssub.s32 %s9, 1
      %s15 = ssub.s32 %s9, 2
      %s16 = sadd.s32 %s9, 1
      %s17 = ssub.s32 %s9, %s16
      %p18 = scmp.eq.s32.totalorder %s17, 0
      %s20 = sadd.s32 %s19, 1
      %s21 = scalar_select %p18, %s19, %s20
      %p24 = pneg %p18
      %p25 = scmp.eq.s32.totalorder %s9, 1
      %p26 = por %p24, %p25
      %p27 = scmp.ne.s32.totalorder %s19, %s22
      %p28 = scmp.eq.s32.totalorder %s9, 0
      %p29 = por %p27, %p28
      %p30 = scmp.ne.s32.totalorder %s19, %s22
      %p31 = scmp.eq.s32.totalorder %s14, 1
      %p32 = por %p30, %p31
      %p33 = scmp.ne.s32.totalorder %s22, %s23
      %p34 = scmp.eq.s32.totalorder %s14, 0
      %p35 = por %p33, %p34
      %p36 = scmp.ne.s32.totalorder %s22, %s23
      %p37 = scmp.eq.s32.totalorder %s15, 1
      %p38 = por %p36, %p37
      %p40 = scmp.ne.s32.totalorder %s23, %s39
      %p41 = scmp.eq.s32.totalorder %s15, 0
      %p42 = por %p40, %p41
      %s44 = sadd.s32 %s43, 1
      %p47 = scmp.eq.s32.totalorder %s9, 1
      %p48 = scmp.ne.s32.totalorder %s43, %s45
      %p49 = scmp.eq.s32.totalorder %s9, 0
      %p50 = por %p48, %p49
      %p51 = scmp.ne.s32.totalorder %s43, %s45
      %p52 = scmp.eq.s32.totalorder %s14, 1
      %p53 = por %p51, %p52
      %p54 = scmp.ne.s32.totalorder %s45, %s46
      %p55 = scmp.eq.s32.totalorder %s14, 0
      %p56 = por %p54, %p55
      %p57 = scmp.ne.s32.totalorder %s45, %s46
      %p58 = scmp.eq.s32.totalorder %s15, 1
      %p59 = por %p57, %p58
      %p61 = scmp.ne.s32.totalorder %s46, %s60
      %p62 = scmp.eq.s32.totalorder %s15, 0
      %p63 = por %p61, %p62
      %s64 = ssub.s32 %s9, %s16
      %p65 = scmp.eq.s32.totalorder %s64, 0
      %s67 = sadd.s32 %s66, 1
      %s68 = scalar_select %p65, %s66, %s67
      %p71 = pneg %p65
      %p72 = scmp.eq.s32.totalorder %s9, 1
      %p73 = por %p71, %p72
      %p74 = scmp.ne.s32.totalorder %s66, %s69
      %p75 = scmp.eq.s32.totalorder %s9, 0
      %p76 = por %p74, %p75
      %p77 = scmp.ne.s32.totalorder %s66, %s69
      %p78 = scmp.eq.s32.totalorder %s14, 1
      %p79 = por %p77, %p78
      %p80 = scmp.ne.s32.totalorder %s69, %s70
      %p81 = scmp.eq.s32.totalorder %s14, 0
      %p82 = por %p80, %p81
      %p83 = scmp.ne.s32.totalorder %s69, %s70
      %p84 = scmp.eq.s32.totalorder %s15, 1
      %p85 = por %p83, %p84
      %p87 = scmp.ne.s32.totalorder %s70, %s86
      %p88 = scmp.eq.s32.totalorder %s15, 0
      %p89 = por %p87, %p88
      %p90 = scmp.le.s32.totalorder 1, %s9
      %p91 = scmp.lt.s32.totalorder %s9, 3
      %p92 = pnand %p90, %p91
      %p93 = pneg %p92
      // Predicated region
      $region9: #{fused_feature_embedding.1} parent=5 // pred_check
        _
      $region10: #{fused_feature_embedding.1} parent=5 // pred_check_branch
        %95 = sbr.rel (%p92) target = $region12
      $region11: #{fused_feature_embedding.1} parent=5 // pred_region
        %s96 = ssub.s32 %s9, 1
        // Predicated region
        $region13: #{fused_feature_embedding.1} parent=11 // pred_check
          %p97 = pneg %p56
        $region14: #{fused_feature_embedding.1} parent=11 // pred_check_branch
          %99 = sbr.rel (%p97) target = $region16
        $region15: #{fused_feature_embedding.1} parent=11 // pred_region
          %s101 = ssub.s32 2048, 2048
          %102 = vsyncadd [#allocation3], %s101
          %s103 = sshll.u32 [#allocation2], 4
          %s104 = int_to_ptr.vmem [resolvable:$true] %s103
          %109 = dma.hbm_to_vmem [thread:$0]  %s1, 2048, %s104, [#allocation3], 128, 128, 8
        $region16: #{fused_feature_embedding.1} parent=11 // pred_fallthru
          _
      $region12: #{fused_feature_embedding.1} parent=5 // pred_fallthru
        _
      %p110 = scmp.lt.s32.totalorder %s9, 2
      // Predicated region
      $region17: #{fused_feature_embedding.1} parent=5 // pred_check
        %p111 = pneg %p110
      $region18: #{fused_feature_embedding.1} parent=5 // pred_check_branch
        %113 = sbr.rel (%p111) target = $region20
      $region19: #{fused_feature_embedding.1} parent=5 // pred_region
        // Predicated region
        $region21: #{fused_feature_embedding.1} parent=19 // pred_check
          %p114 = pneg %p29
        $region22: #{fused_feature_embedding.1} parent=19 // pred_check_branch
          %116 = sbr.rel (%p114) target = $region24
        $region23: #{fused_feature_embedding.1} parent=19 // pred_region
          %p117 = scmp.lt.s32.totalorder %s9, 1
          %s118 = scalar_select %p117, %s9, 1
          %s119 = smul.addr %s118, 8
          %s120 = scalar_lea.vmem %s0, %s119
        $region24: #{fused_feature_embedding.1} parent=19 // pred_fallthru
          _
      $region20: #{fused_feature_embedding.1} parent=5 // pred_fallthru
        _
      %p121 = scmp.le.s32.totalorder 1, %s9
      %p122 = scmp.lt.s32.totalorder %s9, 3
      %p123 = pnand %p121, %p122
      %p124 = pneg %p123
      // Predicated region
      $region25: #{fused_feature_embedding.1} parent=5 // pred_check
        _
      $region26: #{fused_feature_embedding.1} parent=5 // pred_check_branch
        %126 = sbr.rel (%p123) target = $region28
      $region27: #{fused_feature_embedding.1} parent=5 // pred_region
        %s127 = ssub.s32 %s9, 1
        // Predicated region
        $region29: #{fused_feature_embedding.1} parent=27 // pred_check
          %p128 = pneg %p56
        $region30: #{fused_feature_embedding.1} parent=27 // pred_check_branch
          %130 = sbr.rel (%p128) target = $region32
        $region31: #{fused_feature_embedding.1} parent=27 // pred_region
          %131 = dma.done [#allocation3], 2048
        $region32: #{fused_feature_embedding.1} parent=27 // pred_fallthru
          _
        %p132 = scmp.lt.s32.totalorder %s14, 1
        %s133 = scalar_select %p132, %s14, 1
        %s134 = smul.addr %s133, 8
        %s135 = scalar_lea.vmem %s0, %s134
        %p136 = pneg %p35
        %p137 = pneg %p32
        %p138 = pneg %p56
        %p139 = pneg %p53
        %p140 = pneg %p82
        %p141 = pneg %p79
        %p142 = scmp.lt.s32.totalorder %s14, 1
        %s143 = scalar_select %p142, %s14, 1
        %s144 = smul.addr %s143, 8
        %s145 = scalar_lea.vmem %s2, %s144
        %p146 = scmp.lt.s32.totalorder %s14, 1
        %s147 = scalar_select %p146, %s14, 1
        %s148 = smul.addr %s147, 8
        %s149 = scalar_lea.vmem %s0, %s148
        %p150 = scmp.lt.s32.totalorder %s14, 1
        %s151 = scalar_select %p150, %s14, 1
        %s152 = smul.addr %s151, 8
        %s153 = scalar_lea.vmem %s2, %s152
        %v154 = vld [vmem:[%s149] sm:$0xff]
        %v155 = vlaneseq
        %v156 = vand.u32 %v155, 127
        %157 = vset.pattern.permute.xlu0 0
        %158 = vperm.xlu0 %157, %v154
        %v159 = vpop.permute.xlu0 %158
        %vm160 = vcmp.eq.s32.totalorder %v156, %v159
        %161 = vset.pattern.permute.xlu0 1
        %162 = vperm.xlu0 %161, %v154
        %v163 = vpop.permute.xlu0 %162
        %vm164 = vcmp.eq.s32.totalorder %v156, %v163
        %vm165 = vmor %vm160, %vm164
        %v166 = vsel %vm165, 1, 0
        %v167 = vcvt.s32.f32 %v166
        %v168 = vld [vmem:[#allocation2] sm:$0xff]
        %v169 = vld [vmem:[#allocation2 + $0x8] sm:$0xff]
        %v170 = vld [vmem:[#allocation2 + $0x10] sm:$0xff]
        %v171 = vld [vmem:[#allocation2 + $0x18] sm:$0xff]
        %v172 = vld [vmem:[#allocation2 + $0x20] sm:$0xff]
        %v173 = vld [vmem:[#allocation2 + $0x28] sm:$0xff]
        %v174 = vld [vmem:[#allocation2 + $0x30] sm:$0xff]
        %v175 = vld [vmem:[#allocation2 + $0x38] sm:$0xff]
        %v176 = vld [vmem:[#allocation2 + $0x40] sm:$0xff]
        %v177 = vld [vmem:[#allocation2 + $0x48] sm:$0xff]
        %v178 = vld [vmem:[#allocation2 + $0x50] sm:$0xff]
        %v179 = vld [vmem:[#allocation2 + $0x58] sm:$0xff]
        %v180 = vld [vmem:[#allocation2 + $0x60] sm:$0xff]
        %v181 = vld [vmem:[#allocation2 + $0x68] sm:$0xff]
        %v182 = vld [vmem:[#allocation2 + $0x70] sm:$0xff]
        %v183 = vld [vmem:[#allocation2 + $0x78] sm:$0xff]
        %184 = vmatprep.subr.mxu0 0.0
        %185 = vmatpush1.msra.mxu0 %v168
        %186 = vmatprep.subr.mxu0 0.0
        %187 = vmatpush1.msra.mxu0 %v169
        %188 = vmatprep.subr.mxu0 0.0
        %189 = vmatpush1.msra.mxu0 %v170
        %190 = vmatprep.subr.mxu0 0.0
        %191 = vmatpush1.msra.mxu0 %v171
        %192 = vmatprep.subr.mxu0 0.0
        %193 = vmatpush1.msra.mxu0 %v172
        %194 = vmatprep.subr.mxu0 0.0
        %195 = vmatpush1.msra.mxu0 %v173
        %196 = vmatprep.subr.mxu0 0.0
        %197 = vmatpush1.msra.mxu0 %v174
        %198 = vmatprep.subr.mxu0 0.0
        %199 = vmatpush1.msra.mxu0 %v175
        %200 = vmatprep.subr.mxu0 0.0
        %201 = vmatpush1.msra.mxu0 %v176
        %202 = vmatprep.subr.mxu0 0.0
        %203 = vmatpush1.msra.mxu0 %v177
        %204 = vmatprep.subr.mxu0 0.0
        %205 = vmatpush1.msra.mxu0 %v178
        %206 = vmatprep.subr.mxu0 0.0
        %207 = vmatpush1.msra.mxu0 %v179
        %208 = vmatprep.subr.mxu0 0.0
        %209 = vmatpush1.msra.mxu0 %v180
        %210 = vmatprep.subr.mxu0 0.0
        %211 = vmatpush1.msra.mxu0 %v181
        %212 = vmatprep.subr.mxu0 0.0
        %213 = vmatpush1.msra.mxu0 %v182
        %214 = vmatprep.subr.mxu0 0.0
        %215 = vmatpush1.msra.mxu0 %v183
        %216 = vmatprep.subr.mxu0 0.0
        %217 = vmatpush1.msra.mxu0 0.0
        %218 = vmatprep.subr.mxu0 0.0
        %219 = vmatpush1.msra.mxu0 0.0
        %220 = vmatprep.subr.mxu0 0.0
        %221 = vmatpush1.msra.mxu0 0.0
        %222 = vmatprep.subr.mxu0 0.0
        %223 = vmatpush1.msra.mxu0 0.0
        %224 = vmatprep.subr.mxu0 0.0
        %225 = vmatpush1.msra.mxu0 0.0
        %226 = vmatprep.subr.mxu0 0.0
        %227 = vmatpush1.msra.mxu0 0.0
        %228 = vmatprep.subr.mxu0 0.0
        %229 = vmatpush1.msra.mxu0 0.0
        %230 = vmatprep.subr.mxu0 0.0
        %231 = vmatpush1.msra.mxu0 0.0
        %232 = vmatprep.subr.mxu0 0.0
        %233 = vmatpush1.msra.mxu0 0.0
        %234 = vmatprep.subr.mxu0 0.0
        %235 = vmatpush1.msra.mxu0 0.0
        %236 = vmatprep.subr.mxu0 0.0
        %237 = vmatpush1.msra.mxu0 0.0
        %238 = vmatprep.subr.mxu0 0.0
        %239 = vmatpush1.msra.mxu0 0.0
        %240 = vmatprep.subr.mxu0 0.0
        %241 = vmatpush1.msra.mxu0 0.0
        %242 = vmatprep.subr.mxu0 0.0
        %243 = vmatpush1.msra.mxu0 0.0
        %244 = vmatprep.subr.mxu0 0.0
        %245 = vmatpush1.msra.mxu0 0.0
        %246 = vmatprep.subr.mxu0 0.0
        %247 = vmatpush1.msra.mxu0 0.0
        %248 = vmatprep.mubr.f32.mxu0 0.0
        %249 = vmatmul.mubr.f32.gmra.mrb[0].mxu0 %v167
        %v250 = vpop.f32.mrb[0].mxu0
        %v251 = vadd.f32 0.0, %v250
        %v252 = vpop.f32.mrb[0].mxu0
        %253 = vdwg.mxu0
        %254 = vst [vmem:[%s153] sm:$0xff] %v251
        %p255 = scmp.lt.s32.totalorder %s14, 1
        %s256 = scalar_select %p255, %s14, 1
        %s257 = smul.addr %s256, 8
        %s258 = scalar_lea.vmem %s2, %s257
        // Predicated region
        $region33: #{fused_feature_embedding.1} parent=27 // pred_check
          %p259 = pneg %p79
        $region34: #{fused_feature_embedding.1} parent=27 // pred_check_branch
          %261 = sbr.rel (%p259) target = $region36
        $region35: #{fused_feature_embedding.1} parent=27 // pred_region
          _
        $region36: #{fused_feature_embedding.1} parent=27 // pred_fallthru
          _
      $region28: #{fused_feature_embedding.1} parent=5 // pred_fallthru
        _
      %p262 = scmp.le.s32.totalorder 2, %s9
      // Predicated region
      $region37: #{fused_feature_embedding.1} parent=5 // pred_check
        %p263 = pneg %p262
      $region38: #{fused_feature_embedding.1} parent=5 // pred_check_branch
        %265 = sbr.rel (%p263) target = $region40
      $region39: #{fused_feature_embedding.1} parent=5 // pred_region
        %s266 = ssub.s32 %s9, 2
        // Predicated region
        $region41: #{fused_feature_embedding.1} parent=39 // pred_check
          %p267 = pneg %p85
        $region42: #{fused_feature_embedding.1} parent=39 // pred_check_branch
          %269 = sbr.rel (%p267) target = $region44
        $region43: #{fused_feature_embedding.1} parent=39 // pred_region
          %p270 = scmp.lt.s32.totalorder %s15, 1
          %s271 = scalar_select %p270, %s15, 1
          %s272 = smul.addr %s271, 8
          %s273 = scalar_lea.vmem %s2, %s272
        $region44: #{fused_feature_embedding.1} parent=39 // pred_fallthru
          _
      $region40: #{fused_feature_embedding.1} parent=5 // pred_fallthru
        _
    $region6: #{fused_feature_embedding.1} parent=1 // loop_footer
      %s13 = sadd.s32 1, %s9
    $region7: #{fused_feature_embedding.1} parent=1 // loop_footer_branch
      %8 = sbr.rel target = $region3
    $region8: #{fused_feature_embedding.1} parent=1 // loop_exit
      _
    %274 = vsyncpa [#allocation3], 1
    %s275 = scalar_lea.sflag [#allocation3], 1
    %276 = vsyncpa %s275, 1

</llo_original>
